<compile_context>
chip_gen: v5e
topology: v5e:2x2
jax: 0.10.0
libtpu: 0.0.40
codegen_flags: <defaults>
</compile_context>

<pallas_src>
import math

import jax
import jax.numpy as jnp
from jax.experimental import pallas as pl
from jax.experimental.pallas import tpu as pltpu


def _round_up(a, b):
    return (a + b - 1) // b * b


def _cdiv(a, b):
    return -(-a // b)


# --------------------------------------------------------------------------- #
# Kernel
# --------------------------------------------------------------------------- #
def ffn_kernel(x_ref, w1_ref, b1_ref, w2_ref, b2_ref, o_ref, acc_ref):
    # x_ref:   (tm, D)      token tile, already in compute dtype (bf16 default)
    # w1_ref:  (D, tn)      column slice of W1 (compute dtype)
    # b1_ref:  (1, tn)      f32
    # w2_ref:  (tn, D)      row slice of W2 (compute dtype)
    # b2_ref:  (1, D)       f32
    # o_ref:   (tm, D)      output tile (original dtype)
    # acc_ref: (tm, D) f32  scratch accumulator, resident across the j axis
    j = pl.program_id(1)

    @pl.when(j == 0)
    def _():
        acc_ref[...] = jnp.zeros_like(acc_ref)

    # MXU matmul in compute dtype, f32 accumulation.
    h = jnp.dot(x_ref[...], w1_ref[...], preferred_element_type=jnp.float32)
    h = jnp.maximum(h + b1_ref[...], 0.0)
    acc_ref[...] += jnp.dot(h.astype(w2_ref.dtype), w2_ref[...],
                            preferred_element_type=jnp.float32)

    @pl.when(j == pl.num_programs(1) - 1)
    def _():
        # b2 added once, only at finalize (D_ff is a reduction axis).
        o_ref[...] = (acc_ref[...] + b2_ref[...]).astype(o_ref.dtype)


# --------------------------------------------------------------------------- #
# Tile / VMEM planning
# --------------------------------------------------------------------------- #
def _vmem_capacity_bytes():
    try:
        return int(pltpu.get_tpu_info().vmem_capacity_bytes)
    except Exception:
        # Conservative fallback = smallest generation (v7x-class 64 MiB).
        return 64 << 20


def _tile_vmem_bytes(tm, tn, D, c_isz, out_isz):
    # Double-buffered input/output tiles + single f32 accumulator scratch.
    return (2 * tm * D * c_isz        # x tile
            + 2 * D * tn * c_isz      # W1 tile
            + 2 * tn * 4              # b1 tile (f32)
            + 2 * tn * D * c_isz      # W2 tile
            + 2 * D * 4               # b2 (f32)
            + 2 * tm * D * out_isz    # out tile
            + tm * D * 4)             # accumulator scratch


def _pick_tiles(M, D, D_ff, c_isz, out_isz, vmem_cap, tm_req, tn_req):
    budget = int(vmem_cap * 0.80)
    sub = 16 if c_isz < 4 else 8      # sublane multiple for the compute dtype

    # ---- row tile (tm) ------------------------------------------------------
    if tm_req is None:
        # v5e/v6e (128 MiB VMEM) -> big row tile to clear the HBM roofline,
        # v7x-class (64 MiB)     -> 512 fits with default double buffering.
        tm_req = 1024 if vmem_cap >= (96 << 20) else 512
    M_sub = _round_up(M, sub)
    tm = _round_up(max(1, min(tm_req, M_sub)), sub)
    # Megacore: keep >=2 row tiles when rows are plentiful so the 'parallel'
    # token axis can be sharded across TensorCores (v7x).
    if M_sub >= 512:
        half = _round_up(_cdiv(M_sub, 2), sub)
        if tm > half:
            tm = half
    M_pad = _round_up(M, tm)

    def fits(tn_cand):
        return _tile_vmem_bytes(tm, tn_cand, D, c_isz, out_isz) <= budget

    # ---- D_ff tile (tn) -----------------------------------------------------
    if tn_req is not None:
        if tn_req >= D_ff:
            tn = D_ff
        else:
            assert tn_req % 128 == 0, "D_ff tile must be a multiple of 128 lanes"
            tn = tn_req
    elif fits(D_ff):
        # Weight-resident path: full D_ff block -> constant weight block index
        # -> W1/W2 DMA'd from HBM exactly once for the whole call.
        tn = D_ff
    else:
        tn = None
        # Prefer divisors of D_ff (avoids padding/copying the weights).
        for cand in (2048, 1536, 1024, 768, 512, 384, 256, 128):
            if cand <= D_ff and D_ff % cand == 0 and fits(cand):
                tn = cand
                break
        if tn is None:
            for cand in (1024, 512, 256, 128):
                if fits(cand):
                    tn = cand
                    break
        if tn is None:
            tn = 128
    D_ff_pad = _round_up(D_ff, tn) if tn < D_ff else D_ff
    return tm, M_pad, tn, D_ff_pad


# --------------------------------------------------------------------------- #
# Wrapper
# --------------------------------------------------------------------------- #
def feed_forward(x, w1, b1, w2, b2, *, tm=None, tn=None,
                 compute_dtype=jnp.bfloat16):
    """Fused FFN: relu(x @ w1 + b1) @ w2 + b2.

    x : (B, S, D);  w1 : (D, D_ff);  b1 : (D_ff,);  w2 : (D_ff, D);  b2 : (D,)
    tm / tn : optional row / D_ff tile overrides (auto-chosen from VMEM if None)
    compute_dtype : MXU compute dtype (default bf16); accumulation stays f32.
    """
    B, S, D = x.shape
    D_ff = w1.shape[1]
    M = B * S
    out_dtype = x.dtype
    cdt = jnp.dtype(compute_dtype)
    c_isz = cdt.itemsize
    out_isz = jnp.dtype(out_dtype).itemsize

    vmem_cap = _vmem_capacity_bytes()
    tm_eff, M_pad, tn_eff, D_ff_pad = _pick_tiles(
        M, D, D_ff, c_isz, out_isz, vmem_cap, tm, tn)

    # --- cast once in the wrapper (hoists per-step casts out of the kernel) --
    # NOTE: in a real model the weights would already live in bf16; the cast
    # here is a one-time XLA op outside the kernel's hot loop.
    x2 = x.reshape(M, D).astype(cdt)
    w1c = w1.astype(cdt)
    w2c = w2.astype(cdt)
    b1f = b1.astype(jnp.float32)
    b2f = b2.astype(jnp.float32).reshape(1, D)

    # --- pad ragged dims (zeros contribute nothing to the result) ------------
    if M_pad != M:
        x2 = jnp.pad(x2, ((0, M_pad - M), (0, 0)))
    if D_ff_pad != D_ff:
        # TODO(synk): only hit when no 128-multiple tile divides D_ff and the
        # full D_ff block does not fit VMEM; pad weights once at init instead.
        w1c = jnp.pad(w1c, ((0, 0), (0, D_ff_pad - D_ff)))
        b1f = jnp.pad(b1f, ((0, D_ff_pad - D_ff),))
        w2c = jnp.pad(w2c, ((0, D_ff_pad - D_ff), (0, 0)))
    b1f = b1f.reshape(1, D_ff_pad)

    grid = (M_pad // tm_eff, D_ff_pad // tn_eff)

    # --- VMEM limit: actual footprint + headroom, capped at 85% of physical --
    need = _tile_vmem_bytes(tm_eff, tn_eff, D, c_isz, out_isz)
    vmem_limit = min(max(int(need * 1.25) + (4 << 20), 32 << 20),
                     int(vmem_cap * 0.85))

    # Weights are re-streamed once per row tile only when the D_ff axis is
    # tiled; with a single j step the constant block index means one DMA total.
    n_w_streams = grid[0] if grid[1] > 1 else 1
    cost = pl.CostEstimate(
        flops=int(4 * M_pad * D * D_ff_pad),          # two matmuls
        transcendentals=0,
        bytes_accessed=int(x2.size * c_isz + M_pad * D * out_isz
                           + n_w_streams * (w1c.size + w2c.size) * c_isz
                           + b1f.size * 4 + b2f.size * 4),
    )

    out = pl.pallas_call(
        ffn_kernel,
        out_shape=jax.ShapeDtypeStruct((M_pad, D), out_dtype),
        grid_spec=pltpu.PrefetchScalarGridSpec(
            num_scalar_prefetch=0,
            grid=grid,
            in_specs=[
                pl.BlockSpec((tm_eff, D), lambda i, j: (i, 0)),
                pl.BlockSpec((D, tn_eff), lambda i, j: (0, j)),
                pl.BlockSpec((1, tn_eff), lambda i, j: (0, j)),
                pl.BlockSpec((tn_eff, D), lambda i, j: (j, 0)),
                pl.BlockSpec((1, D), lambda i, j: (0, 0)),
            ],
            out_specs=pl.BlockSpec((tm_eff, D), lambda i, j: (i, 0)),
            scratch_shapes=[pltpu.VMEM((tm_eff, D), jnp.float32)],
        ),
        compiler_params=pltpu.CompilerParams(
            dimension_semantics=("parallel", "arbitrary"),
            vmem_limit_bytes=vmem_limit,
        ),
        cost_estimate=cost,
    )(x2, w1c, b1f, w2c, b2f)

    return out[:M].reshape(B, S, D)


# --------------------------------------------------------------------------- #
# Init / references / tests
# --------------------------------------------------------------------------- #
def init_params(key, D, D_ff, dtype=jnp.float32):
    """Deterministic init mimicking nn.Linear (uniform(-1/sqrt(fan_in), +))."""
    k1, k2, k3, k4 = jax.random.split(key, 4)
    bound1 = 1.0 / math.sqrt(D)
    bound2 = 1.0 / math.sqrt(D_ff)
    # Stored already-transposed relative to PyTorch's (out, in) layout.
    w1 = jax.random.uniform(k1, (D, D_ff), dtype, -bound1, bound1)
    b1 = jax.random.uniform(k2, (D_ff,), dtype, -bound1, bound1)
    w2 = jax.random.uniform(k3, (D_ff, D), dtype, -bound2, bound2)
    b2 = jax.random.uniform(k4, (D,), dtype, -bound2, bound2)
    return w1, b1, w2, b2


def _matched_ref(x, w1, b1, w2, b2, cdt):
    """Reference that applies the same input casts as the kernel (f32 accum)."""
    B, S, D = x.shape
    xf = x.reshape(-1, D).astype(cdt).astype(jnp.float32)
    w1f = w1.astype(cdt).astype(jnp.float32)
    w2f = w2.astype(cdt).astype(jnp.float32)
    h = jnp.maximum(xf @ w1f + b1.astype(jnp.float32), 0.0)
    h = h.astype(cdt).astype(jnp.float32)
    return (h @ w2f + b2.astype(jnp.float32)).reshape(B, S, D)


if __name__ == "__main__":
    # --- Test 1: tiny shapes from the module spec, f32 compute (exact) ------
    B, S, D, D_ff = 2, 8, 32, 64
    key = jax.random.PRNGKey(0)
    kx, kp = jax.random.split(key)
    x = jax.random.normal(kx, (B, S, D), dtype=jnp.float32)
    w1, b1, w2, b2 = init_params(kp, D, D_ff)

    out = jax.block_until_ready(
        feed_forward(x, w1, b1, w2, b2, compute_dtype=jnp.float32))
    ref = (jnp.maximum(x.reshape(-1, D) @ w1 + b1, 0.0) @ w2 + b2).reshape(B, S, D)
    assert out.shape == (B, S, D)
    assert jnp.allclose(out, ref, atol=1e-5, rtol=1e-5)

    # --- Test 2: bf16 default path, row padding + multi-step D_ff reduction --
    B2, S2, D2, D_ff2 = 2, 24, 128, 384          # M=48 -> padded to 64 rows
    kx2, kp2 = jax.random.split(jax.random.PRNGKey(1))
    x2 = jax.random.normal(kx2, (B2, S2, D2), dtype=jnp.float32)
    w1b, b1b, w2b, b2b = init_params(kp2, D2, D_ff2)

    out2 = jax.block_until_ready(
        feed_forward(x2, w1b, b1b, w2b, b2b, tm=32, tn=128))
    ref2 = _matched_ref(x2, w1b, b1b, w2b, b2b, jnp.bfloat16)
    assert out2.shape == (B2, S2, D2)
    assert jnp.allclose(out2, ref2, atol=2e-3, rtol=2e-3)

    # --- Test 3: auto-tiling (bf16, weight-resident D_ff, >=2 row tiles) -----
    B3, S3, D3, D_ff3 = 4, 128, 256, 1024
    kx3, kp3 = jax.random.split(jax.random.PRNGKey(2))
    x3 = jax.random.normal(kx3, (B3, S3, D3), dtype=jnp.float32)
    w1c, b1c, w2c, b2c = init_params(kp3, D3, D_ff3)

    out3 = jax.block_until_ready(feed_forward(x3, w1c, b1c, w2c, b2c))
    ref3 = _matched_ref(x3, w1c, b1c, w2c, b2c, jnp.bfloat16)
    assert out3.shape == (B3, S3, D3)
    assert jnp.allclose(out3, ref3, atol=2e-3, rtol=2e-3)

    print("KERNEL_OK")
</pallas_src>

<mosaic_0001>
module attributes {stable_mosaic.version = 11 : i64} {
  func.func @ffn_kernel(%arg0: i32, %arg1: i32, %arg2: memref<16x32xf32, #tpu.memory_space<vmem>>, %arg3: memref<32x64xf32, #tpu.memory_space<vmem>>, %arg4: memref<1x64xf32, #tpu.memory_space<vmem>>, %arg5: memref<64x32xf32, #tpu.memory_space<vmem>>, %arg6: memref<1x32xf32, #tpu.memory_space<vmem>>, %arg7: memref<16x32xf32, #tpu.memory_space<vmem>>, %arg8: memref<16x32xf32, #tpu.memory_space<vmem>>) attributes {dimension_semantics = [#tpu.dimension_semantics<parallel>, #tpu.dimension_semantics<arbitrary>], iteration_bounds = array<i64: 1, 1>, scalar_prefetch = 0 : i64, scratch_operands = 1 : i64, tpu.core_type = #tpu.core_type<tc>, window_params = [{transform_indices = @transform_0, window_bounds = array<i64: 16, 32>}, {transform_indices = @transform_1, window_bounds = array<i64: 32, 64>}, {transform_indices = @transform_2, window_bounds = array<i64: 1, 64>}, {transform_indices = @transform_3, window_bounds = array<i64: 64, 32>}, {pipeline_mode = #tpu.pipeline_mode<synchronous>, transform_indices = @transform_4, window_bounds = array<i64: 1, 32>}, {transform_indices = @transform_5, window_bounds = array<i64: 16, 32>}]} {
    %c0_i32 = arith.constant 0 : i32
    %0 = arith.cmpi eq, %arg1, %c0_i32 : i32
    %1 = arith.extui %0 : i1 to i32
    %c0_i32_0 = arith.constant 0 : i32
    %2 = arith.cmpi ne, %1, %c0_i32_0 : i32
    scf.if %2 {
      %cst_16 = arith.constant 0.000000e+00 : f32
      %19 = vector.broadcast %cst_16 : f32 to vector<16x32xf32>
      %c0_17 = arith.constant 0 : index
      %c0_18 = arith.constant 0 : index
      %20 = vector.load %arg8[%c0_17, %c0_18] : memref<16x32xf32, #tpu.memory_space<vmem>>, vector<16x32xf32>
      tpu.vector_store %arg8[%c0_17, %c0_18], %19 {strides = array<i32>} : memref<16x32xf32, #tpu.memory_space<vmem>>, vector<16x32xf32>,
    } else {
    }
    %c0 = arith.constant 0 : index
    %c0_1 = arith.constant 0 : index
    %3 = vector.load %arg2[%c0, %c0_1] : memref<16x32xf32, #tpu.memory_space<vmem>>, vector<16x32xf32>
    %c0_2 = arith.constant 0 : index
    %c0_3 = arith.constant 0 : index
    %4 = vector.load %arg3[%c0_2, %c0_3] : memref<32x64xf32, #tpu.memory_space<vmem>>, vector<32x64xf32>
    %cst = arith.constant dense<0.000000e+00> : vector<16x64xf32>
    %5 = tpu.matmul %3, %4, %cst {dimension_numbers = #tpu.dot_dimension_numbers<[1], [0], [0], [1], [0, 0, 1, 1], [], []>} : vector<16x32xf32>, vector<32x64xf32>, vector<16x64xf32> -> vector<16x64xf32>
    %c0_4 = arith.constant 0 : index
    %c0_5 = arith.constant 0 : index
    %6 = vector.load %arg4[%c0_4, %c0_5] : memref<1x64xf32, #tpu.memory_space<vmem>>, vector<1x64xf32>
    %7 = vector.broadcast %6 : vector<1x64xf32> to vector<16x64xf32>
    %8 = arith.addf %5, %7 : vector<16x64xf32>
    %cst_6 = arith.constant 0.000000e+00 : f32
    %9 = vector.broadcast %cst_6 : f32 to vector<16x64xf32>
    %10 = arith.maximumf %8, %9 : vector<16x64xf32>
    %c0_7 = arith.constant 0 : index
    %c0_8 = arith.constant 0 : index
    %11 = vector.load %arg8[%c0_7, %c0_8] : memref<16x32xf32, #tpu.memory_space<vmem>>, vector<16x32xf32>
    %c0_9 = arith.constant 0 : index
    %c0_10 = arith.constant 0 : index
    %12 = vector.load %arg5[%c0_9, %c0_10] : memref<64x32xf32, #tpu.memory_space<vmem>>, vector<64x32xf32>
    %cst_11 = arith.constant dense<0.000000e+00> : vector<16x32xf32>
    %13 = tpu.matmul %10, %12, %cst_11 {dimension_numbers = #tpu.dot_dimension_numbers<[1], [0], [0], [1], [0, 0, 1, 1], [], []>} : vector<16x64xf32>, vector<64x32xf32>, vector<16x32xf32> -> vector<16x32xf32>
    %14 = arith.addf %11, %13 : vector<16x32xf32>
    %c0_12 = arith.constant 0 : index
    %c0_13 = arith.constant 0 : index
    %15 = vector.load %arg8[%c0_12, %c0_13] : memref<16x32xf32, #tpu.memory_space<vmem>>, vector<16x32xf32>
    tpu.vector_store %arg8[%c0_12, %c0_13], %14 {strides = array<i32>} : memref<16x32xf32, #tpu.memory_space<vmem>>, vector<16x32xf32>,
    %c0_i32_14 = arith.constant 0 : i32
    %16 = arith.cmpi eq, %arg1, %c0_i32_14 : i32
    %17 = arith.extui %16 : i1 to i32
    %c0_i32_15 = arith.constant 0 : i32
    %18 = arith.cmpi ne, %17, %c0_i32_15 : i32
    scf.if %18 {
      %c0_16 = arith.constant 0 : index
      %c0_17 = arith.constant 0 : index
      %19 = vector.load %arg8[%c0_16, %c0_17] : memref<16x32xf32, #tpu.memory_space<vmem>>, vector<16x32xf32>
      %c0_18 = arith.constant 0 : index
      %c0_19 = arith.constant 0 : index
      %20 = vector.load %arg6[%c0_18, %c0_19] : memref<1x32xf32, #tpu.memory_space<vmem>>, vector<1x32xf32>
      %21 = vector.broadcast %20 : vector<1x32xf32> to vector<16x32xf32>
      %22 = arith.addf %19, %21 : vector<16x32xf32>
      %c0_20 = arith.constant 0 : index
      %c0_21 = arith.constant 0 : index
      %23 = vector.load %arg7[%c0_20, %c0_21] : memref<16x32xf32, #tpu.memory_space<vmem>>, vector<16x32xf32>
      tpu.vector_store %arg7[%c0_20, %c0_21], %22 {strides = array<i32>} : memref<16x32xf32, #tpu.memory_space<vmem>>, vector<16x32xf32>,
    } else {
    }
    return
  }
  func.func @transform_0(%arg0: i32, %arg1: i32) -> (i32, i32) {
    %c0_i32 = arith.constant 0 : i32
    %c0_i32_0 = arith.constant 0 : i32
    return %arg0, %c0_i32 : i32, i32
  }
  func.func @transform_1(%arg0: i32, %arg1: i32) -> (i32, i32) {
    %c0_i32 = arith.constant 0 : i32
    %c0_i32_0 = arith.constant 0 : i32
    return %c0_i32, %arg1 : i32, i32
  }
  func.func @transform_2(%arg0: i32, %arg1: i32) -> (i32, i32) {
    %c0_i32 = arith.constant 0 : i32
    %c0_i32_0 = arith.constant 0 : i32
    return %c0_i32, %arg1 : i32, i32
  }
  func.func @transform_3(%arg0: i32, %arg1: i32) -> (i32, i32) {
    %c0_i32 = arith.constant 0 : i32
    %c0_i32_0 = arith.constant 0 : i32
    return %arg1, %c0_i32 : i32, i32
  }
  func.func @transform_4(%arg0: i32, %arg1: i32) -> (i32, i32) {
    %c0_i32 = arith.constant 0 : i32
    %c0_i32_0 = arith.constant 0 : i32
    %c0_i32_1 = arith.constant 0 : i32
    return %c0_i32, %c0_i32_0 : i32, i32
  }
  func.func @transform_5(%arg0: i32, %arg1: i32) -> (i32, i32) {
    %c0_i32 = arith.constant 0 : i32
    %c0_i32_0 = arith.constant 0 : i32
    return %arg0, %c0_i32 : i32, i32
  }
}

</mosaic_0001>

<llo_original>
// kernel: tpu_custom_call.1
$region0: #{tpu_custom_call.1}
  #allocation0 [shape = 'u32[]', space=smem, size = 0x4, offset = 0x4, fixed_abs, tag = 'smem constant byte address 0x4 - core index']
  #allocation1 [shape = 'u32[72,128]{1,0:T(1,128)}', space=vmem, size = 0x9000, scoped, tag = 'internal scratch']
  #allocation2 [shape = 'f32[16,32]{1,0:T(8,128)}', space=vmem, size = 0x2000, scoped, tag = 'scratch operand']
  %s0 = inlined_call_operand.vmem [shape: f32[16,32], index: 0, kind: input, shape index: {}]
  %s1 = inlined_call_operand.vmem [shape: f32[32,64], index: 1, kind: input, shape index: {}]
  %s2 = inlined_call_operand.vmem [shape: f32[1,64], index: 2, kind: input, shape index: {}]
  %s3 = inlined_call_operand.vmem [shape: f32[64,32], index: 3, kind: input, shape index: {}]
  %s4 = inlined_call_operand.vmem [shape: f32[1,32], index: 4, kind: input, shape index: {}]
  %s5 = inlined_call_operand.hbm [shape: f32[16,32], index: 5, kind: output, shape index: {}]
  %s6 = sld [smem:[#allocation0]]
  $region38: #{tpu_custom_call.1} parent=0
    _
  %s8 = ssub.s32 1, %s6
  %s9 = scalar_select 0, %s8, %s6
  $region1: #{tpu_custom_call.1} parent=0
    #allocation3 [shape = 'u8[8192]{0}', space=vmem, size = 0x2000, scoped, tag = 'output window, operand 0, single buffered']
    #allocation4 [shape = 's32[1]{0}', space=sflag, size = 0x4, scoped, tag = 'scoped memory for tpu_custom_call.1']
    %10 = vsyncpa [#allocation4], 0
    // Predicated region
    $region2: #{tpu_custom_call.1} parent=1 // pred_check
      _
    $region3: #{tpu_custom_call.1} parent=1 // pred_check_branch
      %12 = sbr.rel (0) target = $region5
    $region4: #{tpu_custom_call.1} parent=1 // pred_region
      _
    $region5: #{tpu_custom_call.1} parent=1 // pred_fallthru
      _
    // Predicated region
    $region6: #{tpu_custom_call.1} parent=1 // pred_check
      _
    $region7: #{tpu_custom_call.1} parent=1 // pred_check_branch
      %14 = sbr.rel (0) target = $region9
    $region8: #{tpu_custom_call.1} parent=1 // pred_region
      _
    $region9: #{tpu_custom_call.1} parent=1 // pred_fallthru
      _
    // Predicated region
    $region10: #{tpu_custom_call.1} parent=1 // pred_check
      _
    $region11: #{tpu_custom_call.1} parent=1 // pred_check_branch
      %16 = sbr.rel (0) target = $region13
    $region12: #{tpu_custom_call.1} parent=1 // pred_region
      _
    $region13: #{tpu_custom_call.1} parent=1 // pred_fallthru
      _
    // Predicated region
    $region14: #{tpu_custom_call.1} parent=1 // pred_check
      _
    $region15: #{tpu_custom_call.1} parent=1 // pred_check_branch
      %18 = sbr.rel (0) target = $region17
    $region16: #{tpu_custom_call.1} parent=1 // pred_region
      _
    $region17: #{tpu_custom_call.1} parent=1 // pred_fallthru
      _
    // Predicated region
    $region18: #{tpu_custom_call.1} parent=1 // pred_check
      _
    $region19: #{tpu_custom_call.1} parent=1 // pred_check_branch
      %20 = sbr.rel (0) target = $region21
    $region20: #{tpu_custom_call.1} parent=1 // pred_region
      _
    $region21: #{tpu_custom_call.1} parent=1 // pred_fallthru
      _
    %p21 = scmp.eq.s32.totalorder 0, 0
    // Predicated region
    $region22: #{tpu_custom_call.1} parent=1 // pred_check
      %p22 = pneg %p21
    $region23: #{tpu_custom_call.1} parent=1 // pred_check_branch
      %24 = sbr.rel (%p22) target = $region25
    $region24: #{tpu_custom_call.1} parent=1 // pred_region
      %vm25 = vcmask 261120
      %26 = vst.msk [vmem:[#allocation2] sm:$0xff] %vm25, 0.0
      %27 = vst.msk [vmem:[#allocation2 + $0x8] sm:$0xff] %vm25, 0.0
    $region25: #{tpu_custom_call.1} parent=1 // pred_fallthru
      _
    %v28 = vld [vmem:[%s0] sm:$0xff]
    %v29 = vld [vmem:[%s0 + $0x8] sm:$0xff]
    %v30 = vld [vmem:[%s1] sm:$0xff]
    %v31 = vld [vmem:[%s1 + $0x8] sm:$0xff]
    %v32 = vld [vmem:[%s1 + $0x10] sm:$0xff]
    %v33 = vld [vmem:[%s1 + $0x18] sm:$0xff]
    %v34 = vld [vmem:[%s2] sm:$0x1]
    %v36 = vperm.slane %v34, 0
    %vm38 = vcmask 261120
    %v40 = vsel %vm38, %v28, 0
    %v43 = vsel %vm38, %v29, 0
    %45 = vmatpush.msra.mxu0 0.0
    %46 = vmatpush.msra.mxu0 0.0
    %47 = vmatpush.msra.mxu0 0.0
    %48 = vmatpush.msra.mxu0 0.0
    %49 = vmatpush.msra.mxu0 0.0
    %50 = vmatpush.msra.mxu0 0.0
    %51 = vmatpush.msra.mxu0 0.0
    %52 = vmatpush.msra.mxu0 0.0
    %53 = vmatpush.msra.mxu0 0.0
    %54 = vmatpush.msra.mxu0 0.0
    %55 = vmatpush.msra.mxu0 0.0
    %56 = vmatpush.msra.mxu0 0.0
    %57 = vmatpush.msra.mxu0 %v33
    %58 = vmatpush.msra.mxu0 %v32
    %59 = vmatpush.msra.mxu0 %v31
    %60 = vmatpush.msra.mxu0 %v30
    %61 = vmatmul.f32.gmra.mxu0 %v40
    %v62 = vpop.f32.mrf.mxu0
    %v63 = vadd.f32 %v36, %v62
    %64 = vmatmul.f32.gmra.mxu0 %v43
    %v65 = vpop.f32.mrf.mxu0
    %v66 = vadd.f32 %v36, %v65
    %67 = vdwg.mxu0
    %v68 = vmax.f32 %v63, 0.0
    %v69 = vmax.f32 %v66, 0.0
    %v70 = vld [vmem:[#allocation2] sm:$0xff]
    %v71 = vld [vmem:[#allocation2 + $0x8] sm:$0xff]
    %v72 = vld [vmem:[%s3] sm:$0xff]
    %v73 = vld [vmem:[%s3 + $0x8] sm:$0xff]
    %v74 = vld [vmem:[%s3 + $0x10] sm:$0xff]
    %v75 = vld [vmem:[%s3 + $0x18] sm:$0xff]
    %v76 = vld [vmem:[%s3 + $0x20] sm:$0xff]
    %v77 = vld [vmem:[%s3 + $0x28] sm:$0xff]
    %v78 = vld [vmem:[%s3 + $0x30] sm:$0xff]
    %v79 = vld [vmem:[%s3 + $0x38] sm:$0xff]
    %vm80 = vcmask 523264
    %v82 = vsel %vm80, %v68, 0
    %v85 = vsel %vm80, %v69, 0
    %87 = vmatpush.msra.mxu0 0.0
    %88 = vmatpush.msra.mxu0 0.0
    %89 = vmatpush.msra.mxu0 0.0
    %90 = vmatpush.msra.mxu0 0.0
    %91 = vmatpush.msra.mxu0 0.0
    %92 = vmatpush.msra.mxu0 0.0
    %93 = vmatpush.msra.mxu0 0.0
    %94 = vmatpush.msra.mxu0 0.0
    %95 = vmatpush.msra.mxu0 %v79
    %96 = vmatpush.msra.mxu0 %v78
    %97 = vmatpush.msra.mxu0 %v77
    %98 = vmatpush.msra.mxu0 %v76
    %99 = vmatpush.msra.mxu0 %v75
    %100 = vmatpush.msra.mxu0 %v74
    %101 = vmatpush.msra.mxu0 %v73
    %102 = vmatpush.msra.mxu0 %v72
    %103 = vmatmul.f32.gmra.mxu0 %v82
    %v104 = vpop.f32.mrf.mxu0
    %v105 = vadd.f32 0.0, %v104
    %106 = vmatmul.f32.gmra.mxu0 %v85
    %v107 = vpop.f32.mrf.mxu0
    %v108 = vadd.f32 0.0, %v107
    %109 = vdwg.mxu0
    %v110 = vadd.f32 %v70, %v105
    %v111 = vadd.f32 %v71, %v108
    %112 = vst.msk [vmem:[#allocation2] sm:$0xff] %vm38, %v110
    %113 = vst.msk [vmem:[#allocation2 + $0x8] sm:$0xff] %vm38, %v111
    // Predicated region
    $region26: #{tpu_custom_call.1} parent=1 // pred_check
      %p114 = pneg %p21
    $region27: #{tpu_custom_call.1} parent=1 // pred_check_branch
      %116 = sbr.rel (%p114) target = $region29
    $region28: #{tpu_custom_call.1} parent=1 // pred_region
      %v117 = vld [vmem:[#allocation2] sm:$0xff]
      %v118 = vld [vmem:[#allocation2 + $0x8] sm:$0xff]
      %v119 = vld [vmem:[%s4] sm:$0x1]
      %v121 = vperm.slane %v119, 0
      %v123 = vadd.f32 %v117, %v121
      %v124 = vadd.f32 %v118, %v121
      %125 = vst.msk [vmem:[#allocation3] sm:$0xff] %vm38, %v123
      %126 = vst.msk [vmem:[#allocation3 + $0x8] sm:$0xff] %vm38, %v124
    $region29: #{tpu_custom_call.1} parent=1 // pred_fallthru
      _
    // Predicated region
    $region30: #{tpu_custom_call.1} parent=1 // pred_check
      _
    $region31: #{tpu_custom_call.1} parent=1 // pred_check_branch
      %128 = sbr.rel (0) target = $region33
    $region32: #{tpu_custom_call.1} parent=1 // pred_region
      %130 = vsyncadd [#allocation4], 0
      %s131 = sshll.u32 [#allocation3], 4
      %s132 = int_to_ptr.vmem [resolvable:$true] %s131
      %s133 = sshll.u32 %s5, 4
      %s134 = int_to_ptr.hbm [resolvable:$true] %s133
      %139 = dma.vmem_to_hbm [thread:$0]  %s132, 256, %s134, [#allocation4], 128, 128, 8
    $region33: #{tpu_custom_call.1} parent=1 // pred_fallthru
      _
    // Predicated region
    $region34: #{tpu_custom_call.1} parent=1 // pred_check
      _
    $region35: #{tpu_custom_call.1} parent=1 // pred_check_branch
      %141 = sbr.rel (0) target = $region37
    $region36: #{tpu_custom_call.1} parent=1 // pred_region
      %143 = dma.done [#allocation4], 256
    $region37: #{tpu_custom_call.1} parent=1 // pred_fallthru
      _
    %144 = vsyncpa [#allocation4], 1

</llo_original>
